<compile_context>
chip_gen: v7x
topology: tpu7x:2x2x1
jax: 0.10.0
libtpu: 0.0.40
codegen_flags: <defaults>
</compile_context>

<pallas_src>
import jax
import jax.numpy as jnp
from jax.experimental import pallas as pl
from jax.experimental.pallas import tpu as pltpu

INPUT_DIM = 309
HIDDEN = 256
OUTPUT_DIM = 196
BN_EPS = 1e-5

PADDED_OUT = 256   # 196 -> 256 lane-dense output slab; wrapper slices back to 196.


def _round_up(n, m):
    return ((n + m - 1) // m) * m


def _cdiv(a, b):
    return -(-a // b)


# --------------------------------------------------------------------------- kernel

def _mlp_kernel(x_ref, w1_ref, w2_ref, w3_ref, w4_ref, w5_ref, b_ref, o_ref):
    """One batch tile: 5 matmuls + bias + ReLU. BN (eval) already folded into weights/biases."""

    def layer(h_bf16, w_ref, bias_row, relu):
        # bf16 operands -> MXU, f32 accumulation; bias add + ReLU in f32 (works on all chips).
        y = jnp.dot(h_bf16, w_ref[...], preferred_element_type=jnp.float32)
        y = y + b_ref[bias_row:bias_row + 1, :]
        if relu:
            y = jnp.maximum(y, 0.0)
        return y

    h = x_ref[...].astype(jnp.bfloat16)                       # (TB, 309)
    h = layer(h, w1_ref, 0, True).astype(jnp.bfloat16)
    h = layer(h, w2_ref, 1, True).astype(jnp.bfloat16)
    h = layer(h, w3_ref, 2, True).astype(jnp.bfloat16)
    h = layer(h, w4_ref, 3, True).astype(jnp.bfloat16)
    o_ref[...] = layer(h, w5_ref, 4, False).astype(o_ref.dtype)   # (TB, 256) bf16 store


# --------------------------------------------------------------------------- param prep (once)

def prepare_params(params):
    """Fold BN (eval) into the following layers, pad the output dim to 256 lanes, cast weights
    to bf16, pack biases. Run ONCE outside the jitted forward."""
    # Bias row 4 of the packed (8, HIDDEN) array stores the padded last-layer bias; this only
    # works because PADDED_OUT == HIDDEN.
    assert PADDED_OUT == HIDDEN, "bias packing assumes padded output width == hidden width"

    w = [jnp.asarray(params[f"w{i}"], jnp.float32) for i in range(1, 6)]
    b = [jnp.asarray(params[f"b{i}"], jnp.float32) for i in range(1, 6)]

    # BN_i follows ReLU(fc_i); fold its affine into fc_{i+1}:
    #   (relu_h * s + t) @ W = relu_h @ (diag(s) W) + (t @ W)
    for i in (1, 2, 3, 4):
        scale = params[f"g{i}"] / jnp.sqrt(params[f"rv{i}"] + BN_EPS)
        shift = params[f"be{i}"] - params[f"rm{i}"] * scale
        w_next = w[i]                      # original W_{i+1}, shape (HIDDEN, next_out)
        b[i] = b[i] + shift @ w_next
        w[i] = scale[:, None] * w_next

    # Zero-pad last-layer cols (output dim 196 -> 256). No K-padding: x is fed with K=309.
    w5p = jnp.zeros((HIDDEN, PADDED_OUT), jnp.float32).at[:, :OUTPUT_DIM].set(w[4])
    b5p = jnp.zeros((PADDED_OUT,), jnp.float32).at[:OUTPUT_DIM].set(b[4])

    # Pack the 5 bias vectors into one sublane-aligned (8, 256) f32 array (one DMA).
    bias_pack = jnp.zeros((8, HIDDEN), jnp.float32)
    bias_pack = (bias_pack.at[0].set(b[0]).at[1].set(b[1]).at[2].set(b[2])
                 .at[3].set(b[3]).at[4].set(b5p))

    return (w[0].astype(jnp.bfloat16),     # (309, 256), unpadded K
            w[1].astype(jnp.bfloat16),
            w[2].astype(jnp.bfloat16),
            w[3].astype(jnp.bfloat16),
            w5p.astype(jnp.bfloat16),
            bias_pack)


# --------------------------------------------------------------------------- forward

@jax.jit
def improved_nn_forward(x, prepared):
    """x: (B, INPUT_DIM) float32 (or bfloat16) -> (B, OUTPUT_DIM) float32."""
    w1, w2, w3, w4, w5, bias_pack = prepared
    batch = x.shape[0]

    # Batch tile: large (amortize per-step overhead; v6e/v7x are HBM-bound here), but always
    # >= 2 grid steps for batch > 8 so both v7x TensorCores get work. Partial last tiles are
    # handled by the cdiv grid (OOB reads only affect rows whose writes Pallas masks).
    if batch <= 8:
        tb = batch
    else:
        tb = min(2048, _round_up(_cdiv(batch, 2), 8))
    grid = _cdiv(batch, tb)

    def resident(shape):
        # Full-extent block, same block every grid step -> stays VMEM-resident.
        return pl.BlockSpec(shape, lambda i: (0, 0))

    out = pl.pallas_call(
        _mlp_kernel,
        out_shape=jax.ShapeDtypeStruct((batch, PADDED_OUT), jnp.bfloat16),
        grid=(grid,),
        in_specs=[
            pl.BlockSpec((tb, INPUT_DIM), lambda i: (i, 0)),   # x tile, unpadded K=309
            resident((INPUT_DIM, HIDDEN)),                     # w1 (bf16, 309x256)
            resident((HIDDEN, HIDDEN)),                        # w2
            resident((HIDDEN, HIDDEN)),                        # w3
            resident((HIDDEN, HIDDEN)),                        # w4
            resident((HIDDEN, PADDED_OUT)),                    # w5 (padded cols)
            resident((8, HIDDEN)),                             # packed biases (f32)
        ],
        out_specs=pl.BlockSpec((tb, PADDED_OUT), lambda i: (i, 0)),
        compiler_params=pltpu.CompilerParams(
            dimension_semantics=("parallel",),
            vmem_limit_bytes=48 * 1024 * 1024),                # headroom for tb=2048 on v5e
    )(x, w1, w2, w3, w4, w5, bias_pack)

    return out[:, :OUTPUT_DIM].astype(jnp.float32)


# --------------------------------------------------------------------------- test harness

def init_params(key):
    """Deterministic synthetic parameters (PyTorch-like uniform fan-in bounds)."""
    params = {}
    dims = [(INPUT_DIM, HIDDEN), (HIDDEN, HIDDEN), (HIDDEN, HIDDEN),
            (HIDDEN, HIDDEN), (HIDDEN, OUTPUT_DIM)]
    for i, (fan_in, fan_out) in enumerate(dims, start=1):
        key, kw, kb = jax.random.split(key, 3)
        bound = 1.0 / jnp.sqrt(jnp.float32(fan_in))
        params[f"w{i}"] = jax.random.uniform(
            kw, (fan_in, fan_out), jnp.float32, -bound, bound)   # (in, out): kernel does x @ W
        params[f"b{i}"] = jax.random.uniform(
            kb, (fan_out,), jnp.float32, -bound, bound)
    for i in (1, 2, 3, 4):
        key, kg, kbeta, km, kv = jax.random.split(key, 5)
        params[f"g{i}"] = 1.0 + 0.1 * jax.random.normal(kg, (HIDDEN,), jnp.float32)
        params[f"be{i}"] = 0.1 * jax.random.normal(kbeta, (HIDDEN,), jnp.float32)
        params[f"rm{i}"] = 0.1 * jax.random.normal(km, (HIDDEN,), jnp.float32)
        params[f"rv{i}"] = 1.0 + 0.1 * jax.random.uniform(kv, (HIDDEN,), jnp.float32)
    return params


def reference_forward(x, params):
    """Pure-JAX f32 reference, faithful to the PyTorch module in eval mode."""
    h = x
    for i in (1, 2, 3, 4):
        h = jnp.maximum(h @ params[f"w{i}"] + params[f"b{i}"], 0.0)
        scale = params[f"g{i}"] / jnp.sqrt(params[f"rv{i}"] + BN_EPS)
        shift = params[f"be{i}"] - params[f"rm{i}"] * scale
        h = h * scale + shift
        # Dropout (p~0.003) is identity in eval mode.
    return h @ params["w5"] + params["b5"]


if __name__ == "__main__":
    key = jax.random.PRNGKey(0)
    kp, kx = jax.random.split(key)
    params = init_params(kp)
    prepared = prepare_params(params)   # one-time fold / pad / cast / pack

    batch = 8
    x = jax.random.normal(kx, (batch, INPUT_DIM), jnp.float32)

    out = jax.block_until_ready(improved_nn_forward(x, prepared))
    ref = reference_forward(x, params)

    assert out.shape == (batch, OUTPUT_DIM), out.shape
    # Kernel uses bf16 MXU operands (f32 accumulation) and a bf16 output store, so compare with
    # bf16-appropriate tolerance; error compounds across the 5 layers by design.
    assert jnp.allclose(out, ref, atol=6e-2, rtol=6e-2), (
        float(jnp.max(jnp.abs(out - ref))))

    print("KERNEL_OK")
</pallas_src>

<mosaic_0001>
module attributes {stable_mosaic.version = 11 : i64} {
  func.func @_mlp_kernel(%arg0: i32, %arg1: memref<8x309xf32, #tpu.memory_space<vmem>>, %arg2: memref<309x256xbf16, #tpu.memory_space<vmem>>, %arg3: memref<256x256xbf16, #tpu.memory_space<vmem>>, %arg4: memref<256x256xbf16, #tpu.memory_space<vmem>>, %arg5: memref<256x256xbf16, #tpu.memory_space<vmem>>, %arg6: memref<256x256xbf16, #tpu.memory_space<vmem>>, %arg7: memref<8x256xf32, #tpu.memory_space<vmem>>, %arg8: memref<8x256xbf16, #tpu.memory_space<vmem>>) attributes {dimension_semantics = [#tpu.dimension_semantics<parallel>], iteration_bounds = array<i64: 1>, scalar_prefetch = 0 : i64, scratch_operands = 0 : i64, tpu.core_type = #tpu.core_type<tc>, window_params = [{transform_indices = @transform_0, window_bounds = array<i64: 8, 309>}, {pipeline_mode = #tpu.pipeline_mode<synchronous>, transform_indices = @transform_1, window_bounds = array<i64: 309, 256>}, {pipeline_mode = #tpu.pipeline_mode<synchronous>, transform_indices = @transform_2, window_bounds = array<i64: 256, 256>}, {pipeline_mode = #tpu.pipeline_mode<synchronous>, transform_indices = @transform_3, window_bounds = array<i64: 256, 256>}, {pipeline_mode = #tpu.pipeline_mode<synchronous>, transform_indices = @transform_4, window_bounds = array<i64: 256, 256>}, {pipeline_mode = #tpu.pipeline_mode<synchronous>, transform_indices = @transform_5, window_bounds = array<i64: 256, 256>}, {pipeline_mode = #tpu.pipeline_mode<synchronous>, transform_indices = @transform_6, window_bounds = array<i64: 8, 256>}, {transform_indices = @transform_7, window_bounds = array<i64: 8, 256>}]} {
    %c0 = arith.constant 0 : index
    %c0_0 = arith.constant 0 : index
    %0 = vector.load %arg1[%c0, %c0_0] : memref<8x309xf32, #tpu.memory_space<vmem>>, vector<8x309xf32>
    %1 = arith.truncf %0 : vector<8x309xf32> to vector<8x309xbf16>
    %c0_1 = arith.constant 0 : index
    %c0_2 = arith.constant 0 : index
    %2 = vector.load %arg2[%c0_1, %c0_2] : memref<309x256xbf16, #tpu.memory_space<vmem>>, vector<309x256xbf16>
    %cst = arith.constant dense<0.000000e+00> : vector<8x256xf32>
    %3 = tpu.matmul %1, %2, %cst {dimension_numbers = #tpu.dot_dimension_numbers<[1], [0], [0], [1], [0, 0, 1, 1], [], []>} : vector<8x309xbf16>, vector<309x256xbf16>, vector<8x256xf32> -> vector<8x256xf32>
    %c0_3 = arith.constant 0 : index
    %c0_4 = arith.constant 0 : index
    %4 = vector.load %arg7[%c0_3, %c0_4] : memref<8x256xf32, #tpu.memory_space<vmem>>, vector<1x256xf32>
    %5 = vector.broadcast %4 : vector<1x256xf32> to vector<8x256xf32>
    %6 = arith.addf %3, %5 : vector<8x256xf32>
    %cst_5 = arith.constant 0.000000e+00 : f32
    %7 = vector.broadcast %cst_5 : f32 to vector<8x256xf32>
    %8 = arith.maximumf %6, %7 : vector<8x256xf32>
    %9 = arith.truncf %8 : vector<8x256xf32> to vector<8x256xbf16>
    %c0_6 = arith.constant 0 : index
    %c0_7 = arith.constant 0 : index
    %10 = vector.load %arg3[%c0_6, %c0_7] : memref<256x256xbf16, #tpu.memory_space<vmem>>, vector<256x256xbf16>
    %cst_8 = arith.constant dense<0.000000e+00> : vector<8x256xf32>
    %11 = tpu.matmul %9, %10, %cst_8 {dimension_numbers = #tpu.dot_dimension_numbers<[1], [0], [0], [1], [0, 0, 1, 1], [], []>} : vector<8x256xbf16>, vector<256x256xbf16>, vector<8x256xf32> -> vector<8x256xf32>
    %c1 = arith.constant 1 : index
    %c0_9 = arith.constant 0 : index
    %12 = vector.load %arg7[%c1, %c0_9] : memref<8x256xf32, #tpu.memory_space<vmem>>, vector<1x256xf32>
    %13 = vector.broadcast %12 : vector<1x256xf32> to vector<8x256xf32>
    %14 = arith.addf %11, %13 : vector<8x256xf32>
    %cst_10 = arith.constant 0.000000e+00 : f32
    %15 = vector.broadcast %cst_10 : f32 to vector<8x256xf32>
    %16 = arith.maximumf %14, %15 : vector<8x256xf32>
    %17 = arith.truncf %16 : vector<8x256xf32> to vector<8x256xbf16>
    %c0_11 = arith.constant 0 : index
    %c0_12 = arith.constant 0 : index
    %18 = vector.load %arg4[%c0_11, %c0_12] : memref<256x256xbf16, #tpu.memory_space<vmem>>, vector<256x256xbf16>
    %cst_13 = arith.constant dense<0.000000e+00> : vector<8x256xf32>
    %19 = tpu.matmul %17, %18, %cst_13 {dimension_numbers = #tpu.dot_dimension_numbers<[1], [0], [0], [1], [0, 0, 1, 1], [], []>} : vector<8x256xbf16>, vector<256x256xbf16>, vector<8x256xf32> -> vector<8x256xf32>
    %c2 = arith.constant 2 : index
    %c0_14 = arith.constant 0 : index
    %20 = vector.load %arg7[%c2, %c0_14] : memref<8x256xf32, #tpu.memory_space<vmem>>, vector<1x256xf32>
    %21 = vector.broadcast %20 : vector<1x256xf32> to vector<8x256xf32>
    %22 = arith.addf %19, %21 : vector<8x256xf32>
    %cst_15 = arith.constant 0.000000e+00 : f32
    %23 = vector.broadcast %cst_15 : f32 to vector<8x256xf32>
    %24 = arith.maximumf %22, %23 : vector<8x256xf32>
    %25 = arith.truncf %24 : vector<8x256xf32> to vector<8x256xbf16>
    %c0_16 = arith.constant 0 : index
    %c0_17 = arith.constant 0 : index
    %26 = vector.load %arg5[%c0_16, %c0_17] : memref<256x256xbf16, #tpu.memory_space<vmem>>, vector<256x256xbf16>
    %cst_18 = arith.constant dense<0.000000e+00> : vector<8x256xf32>
    %27 = tpu.matmul %25, %26, %cst_18 {dimension_numbers = #tpu.dot_dimension_numbers<[1], [0], [0], [1], [0, 0, 1, 1], [], []>} : vector<8x256xbf16>, vector<256x256xbf16>, vector<8x256xf32> -> vector<8x256xf32>
    %c3 = arith.constant 3 : index
    %c0_19 = arith.constant 0 : index
    %28 = vector.load %arg7[%c3, %c0_19] : memref<8x256xf32, #tpu.memory_space<vmem>>, vector<1x256xf32>
    %29 = vector.broadcast %28 : vector<1x256xf32> to vector<8x256xf32>
    %30 = arith.addf %27, %29 : vector<8x256xf32>
    %cst_20 = arith.constant 0.000000e+00 : f32
    %31 = vector.broadcast %cst_20 : f32 to vector<8x256xf32>
    %32 = arith.maximumf %30, %31 : vector<8x256xf32>
    %33 = arith.truncf %32 : vector<8x256xf32> to vector<8x256xbf16>
    %c0_21 = arith.constant 0 : index
    %c0_22 = arith.constant 0 : index
    %34 = vector.load %arg6[%c0_21, %c0_22] : memref<256x256xbf16, #tpu.memory_space<vmem>>, vector<256x256xbf16>
    %cst_23 = arith.constant dense<0.000000e+00> : vector<8x256xf32>
    %35 = tpu.matmul %33, %34, %cst_23 {dimension_numbers = #tpu.dot_dimension_numbers<[1], [0], [0], [1], [0, 0, 1, 1], [], []>} : vector<8x256xbf16>, vector<256x256xbf16>, vector<8x256xf32> -> vector<8x256xf32>
    %c4 = arith.constant 4 : index
    %c0_24 = arith.constant 0 : index
    %36 = vector.load %arg7[%c4, %c0_24] : memref<8x256xf32, #tpu.memory_space<vmem>>, vector<1x256xf32>
    %37 = vector.broadcast %36 : vector<1x256xf32> to vector<8x256xf32>
    %38 = arith.addf %35, %37 : vector<8x256xf32>
    %39 = arith.truncf %38 : vector<8x256xf32> to vector<8x256xbf16>
    %c0_25 = arith.constant 0 : index
    %c0_26 = arith.constant 0 : index
    %40 = vector.load %arg8[%c0_25, %c0_26] : memref<8x256xbf16, #tpu.memory_space<vmem>>, vector<8x256xbf16>
    tpu.vector_store %arg8[%c0_25, %c0_26], %39 {strides = array<i32>} : memref<8x256xbf16, #tpu.memory_space<vmem>>, vector<8x256xbf16>,
    return
  }
  func.func @transform_0(%arg0: i32) -> (i32, i32) {
    %c0_i32 = arith.constant 0 : i32
    %c0_i32_0 = arith.constant 0 : i32
    return %arg0, %c0_i32 : i32, i32
  }
  func.func @transform_1(%arg0: i32) -> (i32, i32) {
    %c0_i32 = arith.constant 0 : i32
    %c0_i32_0 = arith.constant 0 : i32
    %c0_i32_1 = arith.constant 0 : i32
    return %c0_i32, %c0_i32_0 : i32, i32
  }
  func.func @transform_2(%arg0: i32) -> (i32, i32) {
    %c0_i32 = arith.constant 0 : i32
    %c0_i32_0 = arith.constant 0 : i32
    %c0_i32_1 = arith.constant 0 : i32
    return %c0_i32, %c0_i32_0 : i32, i32
  }
  func.func @transform_3(%arg0: i32) -> (i32, i32) {
    %c0_i32 = arith.constant 0 : i32
    %c0_i32_0 = arith.constant 0 : i32
    %c0_i32_1 = arith.constant 0 : i32
    return %c0_i32, %c0_i32_0 : i32, i32
  }
  func.func @transform_4(%arg0: i32) -> (i32, i32) {
    %c0_i32 = arith.constant 0 : i32
    %c0_i32_0 = arith.constant 0 : i32
    %c0_i32_1 = arith.constant 0 : i32
    return %c0_i32, %c0_i32_0 : i32, i32
  }
  func.func @transform_5(%arg0: i32) -> (i32, i32) {
    %c0_i32 = arith.constant 0 : i32
    %c0_i32_0 = arith.constant 0 : i32
    %c0_i32_1 = arith.constant 0 : i32
    return %c0_i32, %c0_i32_0 : i32, i32
  }
  func.func @transform_6(%arg0: i32) -> (i32, i32) {
    %c0_i32 = arith.constant 0 : i32
    %c0_i32_0 = arith.constant 0 : i32
    %c0_i32_1 = arith.constant 0 : i32
    return %c0_i32, %c0_i32_0 : i32, i32
  }
  func.func @transform_7(%arg0: i32) -> (i32, i32) {
    %c0_i32 = arith.constant 0 : i32
    %c0_i32_0 = arith.constant 0 : i32
    return %arg0, %c0_i32 : i32, i32
  }
}

</mosaic_0001>

<llo_original>
// kernel: improved_nn_forward.1
$region0: #{improved_nn_forward.1}
  #allocation0 [shape = 'u32[]', space=smem, size = 0x4, offset = 0x4, fixed_abs, tag = 'smem constant byte address 0x4 - core index']
  #allocation1 [shape = 'u32[144,128]{1,0:T(1,128)}', space=vmem, size = 0x12000, scoped, tag = 'internal scratch']
  %s0 = inlined_call_operand.hbm [shape: f32[8,309], index: 0, kind: input, shape index: {}]
  %s1 = inlined_call_operand.hbm [shape: bf16[309,256], index: 1, kind: input, shape index: {}]
  %s2 = inlined_call_operand.hbm [shape: bf16[256,256], index: 2, kind: input, shape index: {}]
  %s3 = inlined_call_operand.hbm [shape: bf16[256,256], index: 3, kind: input, shape index: {}]
  %s4 = inlined_call_operand.hbm [shape: bf16[256,256], index: 4, kind: input, shape index: {}]
  %s5 = inlined_call_operand.hbm [shape: bf16[256,256], index: 5, kind: input, shape index: {}]
  %s6 = inlined_call_operand.vmem [shape: f32[8,256], index: 6, kind: input, shape index: {}]
  %s7 = inlined_call_operand.vmem [shape: bf16[8,256], index: 7, kind: output, shape index: {}]
  %s8 = sld [smem:[#allocation0]]
  $region62: #{improved_nn_forward.1} parent=0
    _
  %s10 = ssub.s32 1, %s8
  %s11 = scalar_select 0, %s10, %s8
  $region1: #{improved_nn_forward.1} parent=0
    #allocation2 [shape = 'u8[12288]{0}', space=vmem, size = 0x3000, scoped, tag = 'input window, operand 0, single buffered']
    #allocation3 [shape = 's32[1]{0}', space=sflag, size = 0x4, scoped, tag = 'scoped memory for improved_nn_forward.1']
    #allocation4 [shape = 'u8[159744]{0}', space=vmem, size = 0x27000, scoped, tag = 'input window, operand 1, single buffered']
    #allocation5 [shape = 's32[1]{0}', space=sflag, size = 0x4, scoped, tag = 'scoped memory for improved_nn_forward.1']
    #allocation6 [shape = 'u8[131072]{0}', space=vmem, size = 0x20000, scoped, tag = 'input window, operand 2, single buffered']
    #allocation7 [shape = 'u8[131072]{0}', space=vmem, size = 0x20000, scoped, tag = 'input window, operand 3, single buffered']
    #allocation8 [shape = 's32[1]{0}', space=sflag, size = 0x4, scoped, tag = 'scoped memory for improved_nn_forward.1']
    #allocation9 [shape = 'u8[131072]{0}', space=vmem, size = 0x20000, scoped, tag = 'input window, operand 4, single buffered']
    #allocation10 [shape = 'u8[131072]{0}', space=vmem, size = 0x20000, scoped, tag = 'input window, operand 5, single buffered']
    #allocation11 [shape = 's32[1]{0}', space=sflag, size = 0x4, scoped, tag = 'scoped memory for improved_nn_forward.1']
    %12 = vsyncpa [#allocation3], 0
    %13 = vsyncpa [#allocation5], 0
    %14 = vsyncpa [#allocation8], 0
    %15 = vsyncpa [#allocation11], 0
    // Predicated region
    $region2: #{improved_nn_forward.1} parent=1 // pred_check
      _
    $region3: #{improved_nn_forward.1} parent=1 // pred_check_branch
      %17 = sbr.rel (0) target = $region5
    $region4: #{improved_nn_forward.1} parent=1 // pred_region
      %s19 = ssub.s32 384, 384
      %20 = vsyncadd [#allocation3], %s19
      %s22 = sshll.u32 [#allocation2], 4
      %s23 = int_to_ptr.vmem [resolvable:$true] %s22
      %25 = dma.hbm_to_vmem [thread:$0]  %s0, 384, %s23, [#allocation3]
    $region5: #{improved_nn_forward.1} parent=1 // pred_fallthru
      _
    // Predicated region
    $region6: #{improved_nn_forward.1} parent=1 // pred_check
      _
    $region7: #{improved_nn_forward.1} parent=1 // pred_check_branch
      %27 = sbr.rel (0) target = $region9
    $region8: #{improved_nn_forward.1} parent=1 // pred_region
      %s29 = ssub.s32 4992, 4992
      %30 = vsyncadd [#allocation5], %s29
      %s31 = sshll.u32 [#allocation4], 4
      %s32 = int_to_ptr.vmem [resolvable:$true] %s31
      %37 = dma.hbm_to_vmem [thread:$0]  %s1, 4992, %s32, [#allocation5], 128, 128, 8
    $region9: #{improved_nn_forward.1} parent=1 // pred_fallthru
      _
    // Predicated region
    $region10: #{improved_nn_forward.1} parent=1 // pred_check
      _
    $region11: #{improved_nn_forward.1} parent=1 // pred_check_branch
      %39 = sbr.rel (0) target = $region13
    $region12: #{improved_nn_forward.1} parent=1 // pred_region
      %s41 = ssub.s32 4096, 4096
      %42 = vsyncadd [#allocation5], %s41
      %s43 = sshll.u32 [#allocation6], 4
      %s44 = int_to_ptr.vmem [resolvable:$true] %s43
      %49 = dma.hbm_to_vmem [thread:$0]  %s2, 4096, %s44, [#allocation5], 128, 128, 8
    $region13: #{improved_nn_forward.1} parent=1 // pred_fallthru
      _
    // Predicated region
    $region14: #{improved_nn_forward.1} parent=1 // pred_check
      _
    $region15: #{improved_nn_forward.1} parent=1 // pred_check_branch
      %51 = sbr.rel (0) target = $region17
    $region16: #{improved_nn_forward.1} parent=1 // pred_region
      %s53 = ssub.s32 4096, 4096
      %54 = vsyncadd [#allocation8], %s53
      %s55 = sshll.u32 [#allocation7], 4
      %s56 = int_to_ptr.vmem [resolvable:$true] %s55
      %61 = dma.hbm_to_vmem [thread:$0]  %s3, 4096, %s56, [#allocation8], 128, 128, 8
    $region17: #{improved_nn_forward.1} parent=1 // pred_fallthru
      _
    // Predicated region
    $region18: #{improved_nn_forward.1} parent=1 // pred_check
      _
    $region19: #{improved_nn_forward.1} parent=1 // pred_check_branch
      %63 = sbr.rel (0) target = $region21
    $region20: #{improved_nn_forward.1} parent=1 // pred_region
      %s65 = ssub.s32 4096, 4096
      %66 = vsyncadd [#allocation8], %s65
      %s67 = sshll.u32 [#allocation9], 4
      %s68 = int_to_ptr.vmem [resolvable:$true] %s67
      %73 = dma.hbm_to_vmem [thread:$0]  %s4, 4096, %s68, [#allocation8], 128, 128, 8
    $region21: #{improved_nn_forward.1} parent=1 // pred_fallthru
      _
    // Predicated region
    $region22: #{improved_nn_forward.1} parent=1 // pred_check
      _
    $region23: #{improved_nn_forward.1} parent=1 // pred_check_branch
      %75 = sbr.rel (0) target = $region25
    $region24: #{improved_nn_forward.1} parent=1 // pred_region
      %s77 = ssub.s32 4096, 4096
      %78 = vsyncadd [#allocation11], %s77
      %s79 = sshll.u32 [#allocation10], 4
      %s80 = int_to_ptr.vmem [resolvable:$true] %s79
      %85 = dma.hbm_to_vmem [thread:$0]  %s5, 4096, %s80, [#allocation11], 128, 128, 8
    $region25: #{improved_nn_forward.1} parent=1 // pred_fallthru
      _
    // Predicated region
    $region26: #{improved_nn_forward.1} parent=1 // pred_check
      _
    $region27: #{improved_nn_forward.1} parent=1 // pred_check_branch
      %87 = sbr.rel (0) target = $region29
    $region28: #{improved_nn_forward.1} parent=1 // pred_region
      _
    $region29: #{improved_nn_forward.1} parent=1 // pred_fallthru
      _
    // Predicated region
    $region30: #{improved_nn_forward.1} parent=1 // pred_check
      _
    $region31: #{improved_nn_forward.1} parent=1 // pred_check_branch
      %89 = sbr.rel (0) target = $region33
    $region32: #{improved_nn_forward.1} parent=1 // pred_region
      %90 = dma.done [#allocation3], 384
    $region33: #{improved_nn_forward.1} parent=1 // pred_fallthru
      _
    // Predicated region
    $region34: #{improved_nn_forward.1} parent=1 // pred_check
      _
    $region35: #{improved_nn_forward.1} parent=1 // pred_check_branch
      %92 = sbr.rel (0) target = $region37
    $region36: #{improved_nn_forward.1} parent=1 // pred_region
      %93 = dma.done [#allocation5], 4992
    $region37: #{improved_nn_forward.1} parent=1 // pred_fallthru
      _
    // Predicated region
    $region38: #{improved_nn_forward.1} parent=1 // pred_check
      _
    $region39: #{improved_nn_forward.1} parent=1 // pred_check_branch
      %95 = sbr.rel (0) target = $region41
    $region40: #{improved_nn_forward.1} parent=1 // pred_region
      %96 = dma.done [#allocation5], 4096
    $region41: #{improved_nn_forward.1} parent=1 // pred_fallthru
      _
    // Predicated region
    $region42: #{improved_nn_forward.1} parent=1 // pred_check
      _
    $region43: #{improved_nn_forward.1} parent=1 // pred_check_branch
      %98 = sbr.rel (0) target = $region45
    $region44: #{improved_nn_forward.1} parent=1 // pred_region
      %99 = dma.done [#allocation8], 4096
    $region45: #{improved_nn_forward.1} parent=1 // pred_fallthru
      _
    // Predicated region
    $region46: #{improved_nn_forward.1} parent=1 // pred_check
      _
    $region47: #{improved_nn_forward.1} parent=1 // pred_check_branch
      %101 = sbr.rel (0) target = $region49
    $region48: #{improved_nn_forward.1} parent=1 // pred_region
      %102 = dma.done [#allocation8], 4096
    $region49: #{improved_nn_forward.1} parent=1 // pred_fallthru
      _
    // Predicated region
    $region50: #{improved_nn_forward.1} parent=1 // pred_check
      _
    $region51: #{improved_nn_forward.1} parent=1 // pred_check_branch
      %104 = sbr.rel (0) target = $region53
    $region52: #{improved_nn_forward.1} parent=1 // pred_region
      %105 = dma.done [#allocation11], 4096
    $region53: #{improved_nn_forward.1} parent=1 // pred_fallthru
      _
    %v107 = vld [vmem:[#allocation2] sm:$0xff]
    %v108 = vld [vmem:[#allocation2 + $0x8] sm:$0xff]
    %v109 = vld [vmem:[#allocation2 + $0x10] sm:$0xff]
    %v110 = vpack.c.bf16 %v107, %v107
    %v111 = vpack.c.bf16 %v108, %v108
    %v112 = vpack.c.bf16 %v109, %v109
    %v113 = vld [vmem:[#allocation4] sm:$0xff]
    %v114 = vld [vmem:[#allocation4 + $0x8] sm:$0xff]
    %v115 = vld [vmem:[#allocation4 + $0x10] sm:$0xff]
    %v116 = vld [vmem:[#allocation4 + $0x18] sm:$0xff]
    %v117 = vld [vmem:[#allocation4 + $0x20] sm:$0xff]
    %v118 = vld [vmem:[#allocation4 + $0x28] sm:$0xff]
    %v119 = vld [vmem:[#allocation4 + $0x30] sm:$0xff]
    %v120 = vld [vmem:[#allocation4 + $0x38] sm:$0xff]
    %v121 = vld [vmem:[#allocation4 + $0x40] sm:$0xff]
    %v122 = vld [vmem:[#allocation4 + $0x48] sm:$0xff]
    %v123 = vld [vmem:[#allocation4 + $0x50] sm:$0xff]
    %v124 = vld [vmem:[#allocation4 + $0x58] sm:$0xff]
    %v125 = vld [vmem:[#allocation4 + $0x60] sm:$0xff]
    %v126 = vld [vmem:[#allocation4 + $0x68] sm:$0xff]
    %v127 = vld [vmem:[#allocation4 + $0x70] sm:$0xff]
    %v128 = vld [vmem:[#allocation4 + $0x78] sm:$0xff]
    %v129 = vld [vmem:[#allocation4 + $0x80] sm:$0xff]
    %v130 = vld [vmem:[#allocation4 + $0x88] sm:$0xff]
    %v131 = vld [vmem:[#allocation4 + $0x90] sm:$0xff]
    %v132 = vld [vmem:[#allocation4 + $0x98] sm:$0xff]
    %v133 = vld [vmem:[#allocation4 + $0xa0] sm:$0xff]
    %v134 = vld [vmem:[#allocation4 + $0xa8] sm:$0xff]
    %v135 = vld [vmem:[#allocation4 + $0xb0] sm:$0xff]
    %v136 = vld [vmem:[#allocation4 + $0xb8] sm:$0xff]
    %v137 = vld [vmem:[#allocation4 + $0xc0] sm:$0xff]
    %v138 = vld [vmem:[#allocation4 + $0xc8] sm:$0xff]
    %v139 = vld [vmem:[#allocation4 + $0xd0] sm:$0xff]
    %v140 = vld [vmem:[#allocation4 + $0xd8] sm:$0xff]
    %v141 = vld [vmem:[#allocation4 + $0xe0] sm:$0xff]
    %v142 = vld [vmem:[#allocation4 + $0xe8] sm:$0xff]
    %v143 = vld [vmem:[#allocation4 + $0xf0] sm:$0xff]
    %v144 = vld [vmem:[#allocation4 + $0xf8] sm:$0xff]
    %v145 = vld [vmem:[#allocation4 + $0x100] sm:$0xff]
    %v146 = vld [vmem:[#allocation4 + $0x108] sm:$0xff]
    %v147 = vld [vmem:[#allocation4 + $0x110] sm:$0xff]
    %v148 = vld [vmem:[#allocation4 + $0x118] sm:$0xff]
    %v149 = vld [vmem:[#allocation4 + $0x120] sm:$0xff]
    %v150 = vld [vmem:[#allocation4 + $0x128] sm:$0xff]
    %v151 = vld [vmem:[#allocation4 + $0x130] sm:$0x77]
    %v152 = vld [vmem:[%s6] ss:$8 sm:$0x3]
    %v154 = vlaneseq
    %v155 = vshrl.u32 %v154, 7
    %v156 = vsub.s32 0, %v155
    %v157 = vrot.slane %v152, %v156
    %v158 = vlaneseq
    %v159 = vshrl.u32 %v158, 7
    %v160 = vsub.s32 1, %v159
    %v161 = vrot.slane %v152, %v160
    %v203 = vunpack.c.l.b16 %v113
    %v204 = vunpack.c.h.b16 %v113
    %v205 = vunpack.c.l.b16 %v114
    %v206 = vunpack.c.h.b16 %v114
    %v207 = vunpack.c.l.b16 %v115
    %v208 = vunpack.c.h.b16 %v115
    %v209 = vunpack.c.l.b16 %v116
    %v210 = vunpack.c.h.b16 %v116
    %v211 = vunpack.c.l.b16 %v117
    %v212 = vunpack.c.h.b16 %v117
    %v213 = vunpack.c.l.b16 %v118
    %v214 = vunpack.c.h.b16 %v118
    %v215 = vunpack.c.l.b16 %v119
    %v216 = vunpack.c.h.b16 %v119
    %v217 = vunpack.c.l.b16 %v120
    %v218 = vunpack.c.h.b16 %v120
    %v219 = vunpack.c.l.b16 %v121
    %v220 = vunpack.c.h.b16 %v121
    %v221 = vunpack.c.l.b16 %v122
    %v222 = vunpack.c.h.b16 %v122
    %v223 = vunpack.c.l.b16 %v123
    %v224 = vunpack.c.h.b16 %v123
    %v225 = vunpack.c.l.b16 %v124
    %v226 = vunpack.c.h.b16 %v124
    %v227 = vunpack.c.l.b16 %v125
    %v228 = vunpack.c.h.b16 %v125
    %v229 = vunpack.c.l.b16 %v126
    %v230 = vunpack.c.h.b16 %v126
    %v231 = vunpack.c.l.b16 %v127
    %v232 = vunpack.c.h.b16 %v127
    %v233 = vunpack.c.l.b16 %v128
    %v234 = vunpack.c.h.b16 %v128
    %v235 = vunpack.c.l.b16 %v129
    %v236 = vunpack.c.h.b16 %v129
    %v237 = vunpack.c.l.b16 %v130
    %v238 = vunpack.c.h.b16 %v130
    %v239 = vunpack.c.l.b16 %v131
    %v240 = vunpack.c.h.b16 %v131
    %v241 = vunpack.c.l.b16 %v132
    %v242 = vunpack.c.h.b16 %v132
    %v243 = vunpack.c.l.b16 %v133
    %v244 = vunpack.c.h.b16 %v133
    %v245 = vunpack.c.l.b16 %v134
    %v246 = vunpack.c.h.b16 %v134
    %v247 = vunpack.c.l.b16 %v135
    %v248 = vunpack.c.h.b16 %v135
    %v249 = vunpack.c.l.b16 %v136
    %v250 = vunpack.c.h.b16 %v136
    %v251 = vunpack.c.l.b16 %v137
    %v252 = vunpack.c.h.b16 %v137
    %v253 = vunpack.c.l.b16 %v138
    %v254 = vunpack.c.h.b16 %v138
    %v255 = vunpack.c.l.b16 %v139
    %v256 = vunpack.c.h.b16 %v139
    %v257 = vunpack.c.l.b16 %v140
    %v258 = vunpack.c.h.b16 %v140
    %v259 = vunpack.c.l.b16 %v141
    %v260 = vunpack.c.h.b16 %v141
    %v261 = vunpack.c.l.b16 %v142
    %v262 = vunpack.c.h.b16 %v142
    %v263 = vunpack.c.l.b16 %v143
    %v264 = vunpack.c.h.b16 %v143
    %v265 = vunpack.c.l.b16 %v144
    %v266 = vunpack.c.h.b16 %v144
    %v267 = vunpack.c.l.b16 %v145
    %v268 = vunpack.c.h.b16 %v145
    %v269 = vunpack.c.l.b16 %v146
    %v270 = vunpack.c.h.b16 %v146
    %v271 = vunpack.c.l.b16 %v147
    %v272 = vunpack.c.h.b16 %v147
    %v273 = vunpack.c.l.b16 %v148
    %v274 = vunpack.c.h.b16 %v148
    %v275 = vunpack.c.l.b16 %v149
    %v276 = vunpack.c.h.b16 %v149
    %v277 = vunpack.c.l.b16 %v150
    %v278 = vunpack.c.h.b16 %v150
    %v279 = vunpack.c.l.b16 %v151
    %v280 = vunpack.c.h.b16 %v151
    %v281 = vpack.c.b16 %v205, %v203
    %v282 = vpack.c.b16 %v206, %v204
    %v283 = vpack.c.b16 %v209, %v207
    %v284 = vpack.c.b16 %v210, %v208
    %v285 = vpack.c.b16 %v213, %v211
    %v286 = vpack.c.b16 %v214, %v212
    %v287 = vpack.c.b16 %v217, %v215
    %v288 = vpack.c.b16 %v218, %v216
    %v289 = vpack.c.b16 %v221, %v219
    %v290 = vpack.c.b16 %v222, %v220
    %v291 = vpack.c.b16 %v225, %v223
    %v292 = vpack.c.b16 %v226, %v224
    %v293 = vpack.c.b16 %v229, %v227
    %v294 = vpack.c.b16 %v230, %v228
    %v295 = vpack.c.b16 %v233, %v231
    %v296 = vpack.c.b16 %v234, %v232
    %v297 = vpack.c.b16 %v237, %v235
    %v298 = vpack.c.b16 %v238, %v236
    %v299 = vpack.c.b16 %v241, %v239
    %v300 = vpack.c.b16 %v242, %v240
    %v301 = vpack.c.b16 %v245, %v243
    %v302 = vpack.c.b16 %v246, %v244
    %v303 = vpack.c.b16 %v249, %v247
    %v304 = vpack.c.b16 %v250, %v248
    %v305 = vpack.c.b16 %v253, %v251
    %v306 = vpack.c.b16 %v254, %v252
    %v307 = vpack.c.b16 %v257, %v255
    %v308 = vpack.c.b16 %v258, %v256
    %v309 = vpack.c.b16 %v261, %v259
    %v310 = vpack.c.b16 %v262, %v260
    %v311 = vpack.c.b16 %v265, %v263
    %v312 = vpack.c.b16 %v266, %v264
    %v313 = vpack.c.b16 %v269, %v267
    %v314 = vpack.c.b16 %v270, %v268
    %v315 = vpack.c.b16 %v273, %v271
    %v316 = vpack.c.b16 %v274, %v272
    %v317 = vpack.c.b16 %v277, %v275
    %v318 = vpack.c.b16 %v278, %v276
    %v319 = vpack.c.b16 %v279, %v279
    %v320 = vpack.c.b16 %v280, %v280
    %vm359 = vcmask 433152
    %v361 = vsel %vm359, %v112, 0
    %vm363 = vcmask 1041408
    %vm364 = vcmask 1042432
    %v365 = vsel %vm363, 4294967295, 65535
    %v366 = vsel %vm364, %v365, 0
    %v368 = vand.u32 %v319, %v366
    %v371 = vand.u32 %v320, %v366
    %373 = vmatprep.subr.bf16.mxu0 %v282
    %374 = vmatpush1.bf16.msra.mxu0 %v281
    %375 = vmatprep.subr.bf16.mxu0 %v284
    %376 = vmatpush1.bf16.msra.mxu0 %v283
    %377 = vmatprep.subr.bf16.mxu0 %v286
    %378 = vmatpush1.bf16.msra.mxu0 %v285
    %379 = vmatprep.subr.bf16.mxu0 %v288
    %380 = vmatpush1.bf16.msra.mxu0 %v287
    %381 = vmatprep.subr.bf16.mxu0 %v290
    %382 = vmatpush1.bf16.msra.mxu0 %v289
    %383 = vmatprep.subr.bf16.mxu0 %v292
    %384 = vmatpush1.bf16.msra.mxu0 %v291
    %385 = vmatprep.subr.bf16.mxu0 %v294
    %386 = vmatpush1.bf16.msra.mxu0 %v293
    %387 = vmatprep.subr.bf16.mxu0 %v296
    %388 = vmatpush1.bf16.msra.mxu0 %v295
    %389 = vmatprep.subr.bf16.mxu0 %v298
    %390 = vmatpush1.bf16.msra.mxu0 %v297
    %391 = vmatprep.subr.bf16.mxu0 %v300
    %392 = vmatpush1.bf16.msra.mxu0 %v299
    %393 = vmatprep.subr.bf16.mxu0 %v302
    %394 = vmatpush1.bf16.msra.mxu0 %v301
    %395 = vmatprep.subr.bf16.mxu0 %v304
    %396 = vmatpush1.bf16.msra.mxu0 %v303
    %397 = vmatprep.subr.bf16.mxu0 %v306
    %398 = vmatpush1.bf16.msra.mxu0 %v305
    %399 = vmatprep.subr.bf16.mxu0 %v308
    %400 = vmatpush1.bf16.msra.mxu0 %v307
    %401 = vmatprep.subr.bf16.mxu0 %v310
    %402 = vmatpush1.bf16.msra.mxu0 %v309
    %403 = vmatprep.subr.bf16.mxu0 %v312
    %404 = vmatpush1.bf16.msra.mxu0 %v311
    %405 = vmatprep.mubr.bf16.mxu0 %v111
    %406 = vmatmul.mubr.bf16.gmra.mrb[0].mxu0 %v110
    %v407 = vpop.f32.mrb[0].mxu0
    %v408 = vadd.f32 %v157, %v407
    %v409 = vpop.f32.mrb[0].mxu0
    %v410 = vadd.f32 %v161, %v409
    %v411 = vpop.f32.mrb[0].mxu0
    %v412 = vpop.f32.mrb[0].mxu0
    %413 = vdwg.mxu0
    %414 = vmatprep.subr.bf16.mxu0 %v314
    %415 = vmatpush1.bf16.msra.mxu0 %v313
    %416 = vmatprep.subr.bf16.mxu0 %v316
    %417 = vmatpush1.bf16.msra.mxu0 %v315
    %418 = vmatprep.subr.bf16.mxu0 %v318
    %419 = vmatpush1.bf16.msra.mxu0 %v317
    %420 = vmatprep.subr.bf16.mxu0 %v371
    %421 = vmatpush1.bf16.msra.mxu0 %v368
    %422 = vmatprep.subr.bf16.mxu0 0
    %423 = vmatpush1.bf16.msra.mxu0 0
    %424 = vmatprep.subr.bf16.mxu0 0
    %425 = vmatpush1.bf16.msra.mxu0 0
    %426 = vmatprep.subr.bf16.mxu0 0
    %427 = vmatpush1.bf16.msra.mxu0 0
    %428 = vmatprep.subr.bf16.mxu0 0
    %429 = vmatpush1.bf16.msra.mxu0 0
    %430 = vmatprep.subr.bf16.mxu0 0
    %431 = vmatpush1.bf16.msra.mxu0 0
    %432 = vmatprep.subr.bf16.mxu0 0
    %433 = vmatpush1.bf16.msra.mxu0 0
    %434 = vmatprep.subr.bf16.mxu0 0
    %435 = vmatpush1.bf16.msra.mxu0 0
    %436 = vmatprep.subr.bf16.mxu0 0
    %437 = vmatpush1.bf16.msra.mxu0 0
    %438 = vmatprep.subr.bf16.mxu0 0
    %439 = vmatpush1.bf16.msra.mxu0 0
    %440 = vmatprep.subr.bf16.mxu0 0
    %441 = vmatpush1.bf16.msra.mxu0 0
    %442 = vmatprep.subr.bf16.mxu0 0
    %443 = vmatpush1.bf16.msra.mxu0 0
    %444 = vmatprep.subr.bf16.mxu0 0
    %445 = vmatpush1.bf16.msra.mxu0 0
    %446 = vmatprep.mubr.bf16.mxu0 0
    %447 = vmatmul.mubr.bf16.gmra.mrb[0].mxu0 %v361
    %v448 = vpop.f32.mrb[0].mxu0
    %v449 = vadd.f32 %v408, %v448
    %v450 = vpop.f32.mrb[0].mxu0
    %v451 = vadd.f32 %v410, %v450
    %v452 = vpop.f32.mrb[0].mxu0
    %v453 = vpop.f32.mrb[0].mxu0
    %454 = vdwg.mxu0
    %v455 = vmax.f32 %v449, 0.0
    %v456 = vmax.f32 %v451, 0.0
    %v457 = vpack.c.bf16 %v455, %v455
    %v458 = vpack.c.bf16 %v456, %v456
    %v459 = vld [vmem:[#allocation6] sm:$0xff]
    %v460 = vld [vmem:[#allocation6 + $0x8] sm:$0xff]
    %v461 = vld [vmem:[#allocation6 + $0x10] sm:$0xff]
    %v462 = vld [vmem:[#allocation6 + $0x18] sm:$0xff]
    %v463 = vld [vmem:[#allocation6 + $0x20] sm:$0xff]
    %v464 = vld [vmem:[#allocation6 + $0x28] sm:$0xff]
    %v465 = vld [vmem:[#allocation6 + $0x30] sm:$0xff]
    %v466 = vld [vmem:[#allocation6 + $0x38] sm:$0xff]
    %v467 = vld [vmem:[#allocation6 + $0x40] sm:$0xff]
    %v468 = vld [vmem:[#allocation6 + $0x48] sm:$0xff]
    %v469 = vld [vmem:[#allocation6 + $0x50] sm:$0xff]
    %v470 = vld [vmem:[#allocation6 + $0x58] sm:$0xff]
    %v471 = vld [vmem:[#allocation6 + $0x60] sm:$0xff]
    %v472 = vld [vmem:[#allocation6 + $0x68] sm:$0xff]
    %v473 = vld [vmem:[#allocation6 + $0x70] sm:$0xff]
    %v474 = vld [vmem:[#allocation6 + $0x78] sm:$0xff]
    %v475 = vld [vmem:[#allocation6 + $0x80] sm:$0xff]
    %v476 = vld [vmem:[#allocation6 + $0x88] sm:$0xff]
    %v477 = vld [vmem:[#allocation6 + $0x90] sm:$0xff]
    %v478 = vld [vmem:[#allocation6 + $0x98] sm:$0xff]
    %v479 = vld [vmem:[#allocation6 + $0xa0] sm:$0xff]
    %v480 = vld [vmem:[#allocation6 + $0xa8] sm:$0xff]
    %v481 = vld [vmem:[#allocation6 + $0xb0] sm:$0xff]
    %v482 = vld [vmem:[#allocation6 + $0xb8] sm:$0xff]
    %v483 = vld [vmem:[#allocation6 + $0xc0] sm:$0xff]
    %v484 = vld [vmem:[#allocation6 + $0xc8] sm:$0xff]
    %v485 = vld [vmem:[#allocation6 + $0xd0] sm:$0xff]
    %v486 = vld [vmem:[#allocation6 + $0xd8] sm:$0xff]
    %v487 = vld [vmem:[#allocation6 + $0xe0] sm:$0xff]
    %v488 = vld [vmem:[#allocation6 + $0xe8] sm:$0xff]
    %v489 = vld [vmem:[#allocation6 + $0xf0] sm:$0xff]
    %v490 = vld [vmem:[#allocation6 + $0xf8] sm:$0xff]
    %s491 = scalar_lea.vmem %s6, 1
    %v492 = vld [vmem:[%s491] ss:$8 sm:$0x3]
    %v494 = vlaneseq
    %v495 = vshrl.u32 %v494, 7
    %v496 = vsub.s32 0, %v495
    %v497 = vrot.slane %v492, %v496
    %v498 = vlaneseq
    %v499 = vshrl.u32 %v498, 7
    %v500 = vsub.s32 1, %v499
    %v501 = vrot.slane %v492, %v500
    %v536 = vunpack.c.l.b16 %v459
    %v537 = vunpack.c.h.b16 %v459
    %v538 = vunpack.c.l.b16 %v460
    %v539 = vunpack.c.h.b16 %v460
    %v540 = vunpack.c.l.b16 %v461
    %v541 = vunpack.c.h.b16 %v461
    %v542 = vunpack.c.l.b16 %v462
    %v543 = vunpack.c.h.b16 %v462
    %v544 = vunpack.c.l.b16 %v463
    %v545 = vunpack.c.h.b16 %v463
    %v546 = vunpack.c.l.b16 %v464
    %v547 = vunpack.c.h.b16 %v464
    %v548 = vunpack.c.l.b16 %v465
    %v549 = vunpack.c.h.b16 %v465
    %v550 = vunpack.c.l.b16 %v466
    %v551 = vunpack.c.h.b16 %v466
    %v552 = vunpack.c.l.b16 %v467
    %v553 = vunpack.c.h.b16 %v467
    %v554 = vunpack.c.l.b16 %v468
    %v555 = vunpack.c.h.b16 %v468
    %v556 = vunpack.c.l.b16 %v469
    %v557 = vunpack.c.h.b16 %v469
    %v558 = vunpack.c.l.b16 %v470
    %v559 = vunpack.c.h.b16 %v470
    %v560 = vunpack.c.l.b16 %v471
    %v561 = vunpack.c.h.b16 %v471
    %v562 = vunpack.c.l.b16 %v472
    %v563 = vunpack.c.h.b16 %v472
    %v564 = vunpack.c.l.b16 %v473
    %v565 = vunpack.c.h.b16 %v473
    %v566 = vunpack.c.l.b16 %v474
    %v567 = vunpack.c.h.b16 %v474
    %v568 = vunpack.c.l.b16 %v475
    %v569 = vunpack.c.h.b16 %v475
    %v570 = vunpack.c.l.b16 %v476
    %v571 = vunpack.c.h.b16 %v476
    %v572 = vunpack.c.l.b16 %v477
    %v573 = vunpack.c.h.b16 %v477
    %v574 = vunpack.c.l.b16 %v478
    %v575 = vunpack.c.h.b16 %v478
    %v576 = vunpack.c.l.b16 %v479
    %v577 = vunpack.c.h.b16 %v479
    %v578 = vunpack.c.l.b16 %v480
    %v579 = vunpack.c.h.b16 %v480
    %v580 = vunpack.c.l.b16 %v481
    %v581 = vunpack.c.h.b16 %v481
    %v582 = vunpack.c.l.b16 %v482
    %v583 = vunpack.c.h.b16 %v482
    %v584 = vunpack.c.l.b16 %v483
    %v585 = vunpack.c.h.b16 %v483
    %v586 = vunpack.c.l.b16 %v484
    %v587 = vunpack.c.h.b16 %v484
    %v588 = vunpack.c.l.b16 %v485
    %v589 = vunpack.c.h.b16 %v485
    %v590 = vunpack.c.l.b16 %v486
    %v591 = vunpack.c.h.b16 %v486
    %v592 = vunpack.c.l.b16 %v487
    %v593 = vunpack.c.h.b16 %v487
    %v594 = vunpack.c.l.b16 %v488
    %v595 = vunpack.c.h.b16 %v488
    %v596 = vunpack.c.l.b16 %v489
    %v597 = vunpack.c.h.b16 %v489
    %v598 = vunpack.c.l.b16 %v490
    %v599 = vunpack.c.h.b16 %v490
    %v600 = vpack.c.b16 %v538, %v536
    %v601 = vpack.c.b16 %v539, %v537
    %v602 = vpack.c.b16 %v542, %v540
    %v603 = vpack.c.b16 %v543, %v541
    %v604 = vpack.c.b16 %v546, %v544
    %v605 = vpack.c.b16 %v547, %v545
    %v606 = vpack.c.b16 %v550, %v548
    %v607 = vpack.c.b16 %v551, %v549
    %v608 = vpack.c.b16 %v554, %v552
    %v609 = vpack.c.b16 %v555, %v553
    %v610 = vpack.c.b16 %v558, %v556
    %v611 = vpack.c.b16 %v559, %v557
    %v612 = vpack.c.b16 %v562, %v560
    %v613 = vpack.c.b16 %v563, %v561
    %v614 = vpack.c.b16 %v566, %v564
    %v615 = vpack.c.b16 %v567, %v565
    %v616 = vpack.c.b16 %v570, %v568
    %v617 = vpack.c.b16 %v571, %v569
    %v618 = vpack.c.b16 %v574, %v572
    %v619 = vpack.c.b16 %v575, %v573
    %v620 = vpack.c.b16 %v578, %v576
    %v621 = vpack.c.b16 %v579, %v577
    %v622 = vpack.c.b16 %v582, %v580
    %v623 = vpack.c.b16 %v583, %v581
    %v624 = vpack.c.b16 %v586, %v584
    %v625 = vpack.c.b16 %v587, %v585
    %v626 = vpack.c.b16 %v590, %v588
    %v627 = vpack.c.b16 %v591, %v589
    %v628 = vpack.c.b16 %v594, %v592
    %v629 = vpack.c.b16 %v595, %v593
    %v630 = vpack.c.b16 %v598, %v596
    %v631 = vpack.c.b16 %v599, %v597
    %664 = vmatprep.subr.bf16.mxu0 %v601
    %665 = vmatpush1.bf16.msra.mxu0 %v600
    %666 = vmatprep.subr.bf16.mxu0 %v603
    %667 = vmatpush1.bf16.msra.mxu0 %v602
    %668 = vmatprep.subr.bf16.mxu0 %v605
    %669 = vmatpush1.bf16.msra.mxu0 %v604
    %670 = vmatprep.subr.bf16.mxu0 %v607
    %671 = vmatpush1.bf16.msra.mxu0 %v606
    %672 = vmatprep.subr.bf16.mxu0 %v609
    %673 = vmatpush1.bf16.msra.mxu0 %v608
    %674 = vmatprep.subr.bf16.mxu0 %v611
    %675 = vmatpush1.bf16.msra.mxu0 %v610
    %676 = vmatprep.subr.bf16.mxu0 %v613
    %677 = vmatpush1.bf16.msra.mxu0 %v612
    %678 = vmatprep.subr.bf16.mxu0 %v615
    %679 = vmatpush1.bf16.msra.mxu0 %v614
    %680 = vmatprep.subr.bf16.mxu0 %v617
    %681 = vmatpush1.bf16.msra.mxu0 %v616
    %682 = vmatprep.subr.bf16.mxu0 %v619
    %683 = vmatpush1.bf16.msra.mxu0 %v618
    %684 = vmatprep.subr.bf16.mxu0 %v621
    %685 = vmatpush1.bf16.msra.mxu0 %v620
    %686 = vmatprep.subr.bf16.mxu0 %v623
    %687 = vmatpush1.bf16.msra.mxu0 %v622
    %688 = vmatprep.subr.bf16.mxu0 %v625
    %689 = vmatpush1.bf16.msra.mxu0 %v624
    %690 = vmatprep.subr.bf16.mxu0 %v627
    %691 = vmatpush1.bf16.msra.mxu0 %v626
    %692 = vmatprep.subr.bf16.mxu0 %v629
    %693 = vmatpush1.bf16.msra.mxu0 %v628
    %694 = vmatprep.subr.bf16.mxu0 %v631
    %695 = vmatpush1.bf16.msra.mxu0 %v630
    %696 = vmatprep.mubr.bf16.mxu0 %v458
    %697 = vmatmul.mubr.bf16.gmra.mrb[0].mxu0 %v457
    %v698 = vpop.f32.mrb[0].mxu0
    %v699 = vadd.f32 %v497, %v698
    %v700 = vpop.f32.mrb[0].mxu0
    %v701 = vadd.f32 %v501, %v700
    %v702 = vpop.f32.mrb[0].mxu0
    %v703 = vpop.f32.mrb[0].mxu0
    %704 = vdwg.mxu0
    %v705 = vmax.f32 %v699, 0.0
    %v706 = vmax.f32 %v701, 0.0
    %v707 = vpack.c.bf16 %v705, %v705
    %v708 = vpack.c.bf16 %v706, %v706
    %v709 = vld [vmem:[#allocation7] sm:$0xff]
    %v710 = vld [vmem:[#allocation7 + $0x8] sm:$0xff]
    %v711 = vld [vmem:[#allocation7 + $0x10] sm:$0xff]
    %v712 = vld [vmem:[#allocation7 + $0x18] sm:$0xff]
    %v713 = vld [vmem:[#allocation7 + $0x20] sm:$0xff]
    %v714 = vld [vmem:[#allocation7 + $0x28] sm:$0xff]
    %v715 = vld [vmem:[#allocation7 + $0x30] sm:$0xff]
    %v716 = vld [vmem:[#allocation7 + $0x38] sm:$0xff]
    %v717 = vld [vmem:[#allocation7 + $0x40] sm:$0xff]
    %v718 = vld [vmem:[#allocation7 + $0x48] sm:$0xff]
    %v719 = vld [vmem:[#allocation7 + $0x50] sm:$0xff]
    %v720 = vld [vmem:[#allocation7 + $0x58] sm:$0xff]
    %v721 = vld [vmem:[#allocation7 + $0x60] sm:$0xff]
    %v722 = vld [vmem:[#allocation7 + $0x68] sm:$0xff]
    %v723 = vld [vmem:[#allocation7 + $0x70] sm:$0xff]
    %v724 = vld [vmem:[#allocation7 + $0x78] sm:$0xff]
    %v725 = vld [vmem:[#allocation7 + $0x80] sm:$0xff]
    %v726 = vld [vmem:[#allocation7 + $0x88] sm:$0xff]
    %v727 = vld [vmem:[#allocation7 + $0x90] sm:$0xff]
    %v728 = vld [vmem:[#allocation7 + $0x98] sm:$0xff]
    %v729 = vld [vmem:[#allocation7 + $0xa0] sm:$0xff]
    %v730 = vld [vmem:[#allocation7 + $0xa8] sm:$0xff]
    %v731 = vld [vmem:[#allocation7 + $0xb0] sm:$0xff]
    %v732 = vld [vmem:[#allocation7 + $0xb8] sm:$0xff]
    %v733 = vld [vmem:[#allocation7 + $0xc0] sm:$0xff]
    %v734 = vld [vmem:[#allocation7 + $0xc8] sm:$0xff]
    %v735 = vld [vmem:[#allocation7 + $0xd0] sm:$0xff]
    %v736 = vld [vmem:[#allocation7 + $0xd8] sm:$0xff]
    %v737 = vld [vmem:[#allocation7 + $0xe0] sm:$0xff]
    %v738 = vld [vmem:[#allocation7 + $0xe8] sm:$0xff]
    %v739 = vld [vmem:[#allocation7 + $0xf0] sm:$0xff]
    %v740 = vld [vmem:[#allocation7 + $0xf8] sm:$0xff]
    %s741 = scalar_lea.vmem %s6, 2
    %v742 = vld [vmem:[%s741] ss:$8 sm:$0x3]
    %v744 = vlaneseq
    %v745 = vshrl.u32 %v744, 7
    %v746 = vsub.s32 0, %v745
    %v747 = vrot.slane %v742, %v746
    %v748 = vlaneseq
    %v749 = vshrl.u32 %v748, 7
    %v750 = vsub.s32 1, %v749
    %v751 = vrot.slane %v742, %v750
    %v786 = vunpack.c.l.b16 %v709
    %v787 = vunpack.c.h.b16 %v709
    %v788 = vunpack.c.l.b16 %v710
    %v789 = vunpack.c.h.b16 %v710
    %v790 = vunpack.c.l.b16 %v711
    %v791 = vunpack.c.h.b16 %v711
    %v792 = vunpack.c.l.b16 %v712
    %v793 = vunpack.c.h.b16 %v712
    %v794 = vunpack.c.l.b16 %v713
    %v795 = vunpack.c.h.b16 %v713
    %v796 = vunpack.c.l.b16 %v714
    %v797 = vunpack.c.h.b16 %v714
    %v798 = vunpack.c.l.b16 %v715
    %v799 = vunpack.c.h.b16 %v715
    %v800 = vunpack.c.l.b16 %v716
    %v801 = vunpack.c.h.b16 %v716
    %v802 = vunpack.c.l.b16 %v717
    %v803 = vunpack.c.h.b16 %v717
    %v804 = vunpack.c.l.b16 %v718
    %v805 = vunpack.c.h.b16 %v718
    %v806 = vunpack.c.l.b16 %v719
    %v807 = vunpack.c.h.b16 %v719
    %v808 = vunpack.c.l.b16 %v720
    %v809 = vunpack.c.h.b16 %v720
    %v810 = vunpack.c.l.b16 %v721
    %v811 = vunpack.c.h.b16 %v721
    %v812 = vunpack.c.l.b16 %v722
    %v813 = vunpack.c.h.b16 %v722
    %v814 = vunpack.c.l.b16 %v723
    %v815 = vunpack.c.h.b16 %v723
    %v816 = vunpack.c.l.b16 %v724
    %v817 = vunpack.c.h.b16 %v724
    %v818 = vunpack.c.l.b16 %v725
    %v819 = vunpack.c.h.b16 %v725
    %v820 = vunpack.c.l.b16 %v726
    %v821 = vunpack.c.h.b16 %v726
    %v822 = vunpack.c.l.b16 %v727
    %v823 = vunpack.c.h.b16 %v727
    %v824 = vunpack.c.l.b16 %v728
    %v825 = vunpack.c.h.b16 %v728
    %v826 = vunpack.c.l.b16 %v729
    %v827 = vunpack.c.h.b16 %v729
    %v828 = vunpack.c.l.b16 %v730
    %v829 = vunpack.c.h.b16 %v730
    %v830 = vunpack.c.l.b16 %v731
    %v831 = vunpack.c.h.b16 %v731
    %v832 = vunpack.c.l.b16 %v732
    %v833 = vunpack.c.h.b16 %v732
    %v834 = vunpack.c.l.b16 %v733
    %v835 = vunpack.c.h.b16 %v733
    %v836 = vunpack.c.l.b16 %v734
    %v837 = vunpack.c.h.b16 %v734
    %v838 = vunpack.c.l.b16 %v735
    %v839 = vunpack.c.h.b16 %v735
    %v840 = vunpack.c.l.b16 %v736
    %v841 = vunpack.c.h.b16 %v736
    %v842 = vunpack.c.l.b16 %v737
    %v843 = vunpack.c.h.b16 %v737
    %v844 = vunpack.c.l.b16 %v738
    %v845 = vunpack.c.h.b16 %v738
    %v846 = vunpack.c.l.b16 %v739
    %v847 = vunpack.c.h.b16 %v739
    %v848 = vunpack.c.l.b16 %v740
    %v849 = vunpack.c.h.b16 %v740
    %v850 = vpack.c.b16 %v788, %v786
    %v851 = vpack.c.b16 %v789, %v787
    %v852 = vpack.c.b16 %v792, %v790
    %v853 = vpack.c.b16 %v793, %v791
    %v854 = vpack.c.b16 %v796, %v794
    %v855 = vpack.c.b16 %v797, %v795
    %v856 = vpack.c.b16 %v800, %v798
    %v857 = vpack.c.b16 %v801, %v799
    %v858 = vpack.c.b16 %v804, %v802
    %v859 = vpack.c.b16 %v805, %v803
    %v860 = vpack.c.b16 %v808, %v806
    %v861 = vpack.c.b16 %v809, %v807
    %v862 = vpack.c.b16 %v812, %v810
    %v863 = vpack.c.b16 %v813, %v811
    %v864 = vpack.c.b16 %v816, %v814
    %v865 = vpack.c.b16 %v817, %v815
    %v866 = vpack.c.b16 %v820, %v818
    %v867 = vpack.c.b16 %v821, %v819
    %v868 = vpack.c.b16 %v824, %v822
    %v869 = vpack.c.b16 %v825, %v823
    %v870 = vpack.c.b16 %v828, %v826
    %v871 = vpack.c.b16 %v829, %v827
    %v872 = vpack.c.b16 %v832, %v830
    %v873 = vpack.c.b16 %v833, %v831
    %v874 = vpack.c.b16 %v836, %v834
    %v875 = vpack.c.b16 %v837, %v835
    %v876 = vpack.c.b16 %v840, %v838
    %v877 = vpack.c.b16 %v841, %v839
    %v878 = vpack.c.b16 %v844, %v842
    %v879 = vpack.c.b16 %v845, %v843
    %v880 = vpack.c.b16 %v848, %v846
    %v881 = vpack.c.b16 %v849, %v847
    %914 = vmatprep.subr.bf16.mxu0 %v851
    %915 = vmatpush1.bf16.msra.mxu0 %v850
    %916 = vmatprep.subr.bf16.mxu0 %v853
    %917 = vmatpush1.bf16.msra.mxu0 %v852
    %918 = vmatprep.subr.bf16.mxu0 %v855
    %919 = vmatpush1.bf16.msra.mxu0 %v854
    %920 = vmatprep.subr.bf16.mxu0 %v857
    %921 = vmatpush1.bf16.msra.mxu0 %v856
    %922 = vmatprep.subr.bf16.mxu0 %v859
    %923 = vmatpush1.bf16.msra.mxu0 %v858
    %924 = vmatprep.subr.bf16.mxu0 %v861
    %925 = vmatpush1.bf16.msra.mxu0 %v860
    %926 = vmatprep.subr.bf16.mxu0 %v863
    %927 = vmatpush1.bf16.msra.mxu0 %v862
    %928 = vmatprep.subr.bf16.mxu0 %v865
    %929 = vmatpush1.bf16.msra.mxu0 %v864
    %930 = vmatprep.subr.bf16.mxu0 %v867
    %931 = vmatpush1.bf16.msra.mxu0 %v866
    %932 = vmatprep.subr.bf16.mxu0 %v869
    %933 = vmatpush1.bf16.msra.mxu0 %v868
    %934 = vmatprep.subr.bf16.mxu0 %v871
    %935 = vmatpush1.bf16.msra.mxu0 %v870
    %936 = vmatprep.subr.bf16.mxu0 %v873
    %937 = vmatpush1.bf16.msra.mxu0 %v872
    %938 = vmatprep.subr.bf16.mxu0 %v875
    %939 = vmatpush1.bf16.msra.mxu0 %v874
    %940 = vmatprep.subr.bf16.mxu0 %v877
    %941 = vmatpush1.bf16.msra.mxu0 %v876
    %942 = vmatprep.subr.bf16.mxu0 %v879
    %943 = vmatpush1.bf16.msra.mxu0 %v878
    %944 = vmatprep.subr.bf16.mxu0 %v881
    %945 = vmatpush1.bf16.msra.mxu0 %v880
    %946 = vmatprep.mubr.bf16.mxu0 %v708
    %947 = vmatmul.mubr.bf16.gmra.mrb[0].mxu0 %v707
    %v948 = vpop.f32.mrb[0].mxu0
    %v949 = vadd.f32 %v747, %v948
    %v950 = vpop.f32.mrb[0].mxu0
    %v951 = vadd.f32 %v751, %v950
    %v952 = vpop.f32.mrb[0].mxu0
    %v953 = vpop.f32.mrb[0].mxu0
    %954 = vdwg.mxu0
    %v955 = vmax.f32 %v949, 0.0
    %v956 = vmax.f32 %v951, 0.0
    %v957 = vpack.c.bf16 %v955, %v955
    %v958 = vpack.c.bf16 %v956, %v956
    %v959 = vld [vmem:[#allocation9] sm:$0xff]
    %v960 = vld [vmem:[#allocation9 + $0x8] sm:$0xff]
    %v961 = vld [vmem:[#allocation9 + $0x10] sm:$0xff]
    %v962 = vld [vmem:[#allocation9 + $0x18] sm:$0xff]
    %v963 = vld [vmem:[#allocation9 + $0x20] sm:$0xff]
    %v964 = vld [vmem:[#allocation9 + $0x28] sm:$0xff]
    %v965 = vld [vmem:[#allocation9 + $0x30] sm:$0xff]
    %v966 = vld [vmem:[#allocation9 + $0x38] sm:$0xff]
    %v967 = vld [vmem:[#allocation9 + $0x40] sm:$0xff]
    %v968 = vld [vmem:[#allocation9 + $0x48] sm:$0xff]
    %v969 = vld [vmem:[#allocation9 + $0x50] sm:$0xff]
    %v970 = vld [vmem:[#allocation9 + $0x58] sm:$0xff]
    %v971 = vld [vmem:[#allocation9 + $0x60] sm:$0xff]
    %v972 = vld [vmem:[#allocation9 + $0x68] sm:$0xff]
    %v973 = vld [vmem:[#allocation9 + $0x70] sm:$0xff]
    %v974 = vld [vmem:[#allocation9 + $0x78] sm:$0xff]
    %v975 = vld [vmem:[#allocation9 + $0x80] sm:$0xff]
    %v976 = vld [vmem:[#allocation9 + $0x88] sm:$0xff]
    %v977 = vld [vmem:[#allocation9 + $0x90] sm:$0xff]
    %v978 = vld [vmem:[#allocation9 + $0x98] sm:$0xff]
    %v979 = vld [vmem:[#allocation9 + $0xa0] sm:$0xff]
    %v980 = vld [vmem:[#allocation9 + $0xa8] sm:$0xff]
    %v981 = vld [vmem:[#allocation9 + $0xb0] sm:$0xff]
    %v982 = vld [vmem:[#allocation9 + $0xb8] sm:$0xff]
    %v983 = vld [vmem:[#allocation9 + $0xc0] sm:$0xff]
    %v984 = vld [vmem:[#allocation9 + $0xc8] sm:$0xff]
    %v985 = vld [vmem:[#allocation9 + $0xd0] sm:$0xff]
    %v986 = vld [vmem:[#allocation9 + $0xd8] sm:$0xff]
    %v987 = vld [vmem:[#allocation9 + $0xe0] sm:$0xff]
    %v988 = vld [vmem:[#allocation9 + $0xe8] sm:$0xff]
    %v989 = vld [vmem:[#allocation9 + $0xf0] sm:$0xff]
    %v990 = vld [vmem:[#allocation9 + $0xf8] sm:$0xff]
    %s991 = scalar_lea.vmem %s6, 3
    %v992 = vld [vmem:[%s991] ss:$8 sm:$0x3]
    %v994 = vlaneseq
    %v995 = vshrl.u32 %v994, 7
    %v996 = vsub.s32 0, %v995
    %v997 = vrot.slane %v992, %v996
    %v998 = vlaneseq
    %v999 = vshrl.u32 %v998, 7
    %v1000 = vsub.s32 1, %v999
    %v1001 = vrot.slane %v992, %v1000
    %v1036 = vunpack.c.l.b16 %v959
    %v1037 = vunpack.c.h.b16 %v959
    %v1038 = vunpack.c.l.b16 %v960
    %v1039 = vunpack.c.h.b16 %v960
    %v1040 = vunpack.c.l.b16 %v961
    %v1041 = vunpack.c.h.b16 %v961
    %v1042 = vunpack.c.l.b16 %v962
    %v1043 = vunpack.c.h.b16 %v962
    %v1044 = vunpack.c.l.b16 %v963
    %v1045 = vunpack.c.h.b16 %v963
    %v1046 = vunpack.c.l.b16 %v964
    %v1047 = vunpack.c.h.b16 %v964
    %v1048 = vunpack.c.l.b16 %v965
    %v1049 = vunpack.c.h.b16 %v965
    %v1050 = vunpack.c.l.b16 %v966
    %v1051 = vunpack.c.h.b16 %v966
    %v1052 = vunpack.c.l.b16 %v967
    %v1053 = vunpack.c.h.b16 %v967
    %v1054 = vunpack.c.l.b16 %v968
    %v1055 = vunpack.c.h.b16 %v968
    %v1056 = vunpack.c.l.b16 %v969
    %v1057 = vunpack.c.h.b16 %v969
    %v1058 = vunpack.c.l.b16 %v970
    %v1059 = vunpack.c.h.b16 %v970
    %v1060 = vunpack.c.l.b16 %v971
    %v1061 = vunpack.c.h.b16 %v971
    %v1062 = vunpack.c.l.b16 %v972
    %v1063 = vunpack.c.h.b16 %v972
    %v1064 = vunpack.c.l.b16 %v973
    %v1065 = vunpack.c.h.b16 %v973
    %v1066 = vunpack.c.l.b16 %v974
    %v1067 = vunpack.c.h.b16 %v974
    %v1068 = vunpack.c.l.b16 %v975
    %v1069 = vunpack.c.h.b16 %v975
    %v1070 = vunpack.c.l.b16 %v976
    %v1071 = vunpack.c.h.b16 %v976
    %v1072 = vunpack.c.l.b16 %v977
    %v1073 = vunpack.c.h.b16 %v977
    %v1074 = vunpack.c.l.b16 %v978
    %v1075 = vunpack.c.h.b16 %v978
    %v1076 = vunpack.c.l.b16 %v979
    %v1077 = vunpack.c.h.b16 %v979
    %v1078 = vunpack.c.l.b16 %v980
    %v1079 = vunpack.c.h.b16 %v980
    %v1080 = vunpack.c.l.b16 %v981
    %v1081 = vunpack.c.h.b16 %v981
    %v1082 = vunpack.c.l.b16 %v982
    %v1083 = vunpack.c.h.b16 %v982
    %v1084 = vunpack.c.l.b16 %v983
    %v1085 = vunpack.c.h.b16 %v983
    %v1086 = vunpack.c.l.b16 %v984
    %v1087 = vunpack.c.h.b16 %v984
    %v1088 = vunpack.c.l.b16 %v985
    %v1089 = vunpack.c.h.b16 %v985
    %v1090 = vunpack.c.l.b16 %v986
    %v1091 = vunpack.c.h.b16 %v986
    %v1092 = vunpack.c.l.b16 %v987
    %v1093 = vunpack.c.h.b16 %v987
    %v1094 = vunpack.c.l.b16 %v988
    %v1095 = vunpack.c.h.b16 %v988
    %v1096 = vunpack.c.l.b16 %v989
    %v1097 = vunpack.c.h.b16 %v989
    %v1098 = vunpack.c.l.b16 %v990
    %v1099 = vunpack.c.h.b16 %v990
    %v1100 = vpack.c.b16 %v1038, %v1036
    %v1101 = vpack.c.b16 %v1039, %v1037
    %v1102 = vpack.c.b16 %v1042, %v1040
    %v1103 = vpack.c.b16 %v1043, %v1041
    %v1104 = vpack.c.b16 %v1046, %v1044
    %v1105 = vpack.c.b16 %v1047, %v1045
    %v1106 = vpack.c.b16 %v1050, %v1048
    %v1107 = vpack.c.b16 %v1051, %v1049
    %v1108 = vpack.c.b16 %v1054, %v1052
    %v1109 = vpack.c.b16 %v1055, %v1053
    %v1110 = vpack.c.b16 %v1058, %v1056
    %v1111 = vpack.c.b16 %v1059, %v1057
    %v1112 = vpack.c.b16 %v1062, %v1060
    %v1113 = vpack.c.b16 %v1063, %v1061
    %v1114 = vpack.c.b16 %v1066, %v1064
    %v1115 = vpack.c.b16 %v1067, %v1065
    %v1116 = vpack.c.b16 %v1070, %v1068
    %v1117 = vpack.c.b16 %v1071, %v1069
    %v1118 = vpack.c.b16 %v1074, %v1072
    %v1119 = vpack.c.b16 %v1075, %v1073
    %v1120 = vpack.c.b16 %v1078, %v1076
    %v1121 = vpack.c.b16 %v1079, %v1077
    %v1122 = vpack.c.b16 %v1082, %v1080
    %v1123 = vpack.c.b16 %v1083, %v1081
    %v1124 = vpack.c.b16 %v1086, %v1084
    %v1125 = vpack.c.b16 %v1087, %v1085
    %v1126 = vpack.c.b16 %v1090, %v1088
    %v1127 = vpack.c.b16 %v1091, %v1089
    %v1128 = vpack.c.b16 %v1094, %v1092
    %v1129 = vpack.c.b16 %v1095, %v1093
    %v1130 = vpack.c.b16 %v1098, %v1096
    %v1131 = vpack.c.b16 %v1099, %v1097
    %1164 = vmatprep.subr.bf16.mxu0 %v1101
    %1165 = vmatpush1.bf16.msra.mxu0 %v1100
    %1166 = vmatprep.subr.bf16.mxu0 %v1103
    %1167 = vmatpush1.bf16.msra.mxu0 %v1102
    %1168 = vmatprep.subr.bf16.mxu0 %v1105
    %1169 = vmatpush1.bf16.msra.mxu0 %v1104
    %1170 = vmatprep.subr.bf16.mxu0 %v1107
    %1171 = vmatpush1.bf16.msra.mxu0 %v1106
    %1172 = vmatprep.subr.bf16.mxu0 %v1109
    %1173 = vmatpush1.bf16.msra.mxu0 %v1108
    %1174 = vmatprep.subr.bf16.mxu0 %v1111
    %1175 = vmatpush1.bf16.msra.mxu0 %v1110
    %1176 = vmatprep.subr.bf16.mxu0 %v1113
    %1177 = vmatpush1.bf16.msra.mxu0 %v1112
    %1178 = vmatprep.subr.bf16.mxu0 %v1115
    %1179 = vmatpush1.bf16.msra.mxu0 %v1114
    %1180 = vmatprep.subr.bf16.mxu0 %v1117
    %1181 = vmatpush1.bf16.msra.mxu0 %v1116
    %1182 = vmatprep.subr.bf16.mxu0 %v1119
    %1183 = vmatpush1.bf16.msra.mxu0 %v1118
    %1184 = vmatprep.subr.bf16.mxu0 %v1121
    %1185 = vmatpush1.bf16.msra.mxu0 %v1120
    %1186 = vmatprep.subr.bf16.mxu0 %v1123
    %1187 = vmatpush1.bf16.msra.mxu0 %v1122
    %1188 = vmatprep.subr.bf16.mxu0 %v1125
    %1189 = vmatpush1.bf16.msra.mxu0 %v1124
    %1190 = vmatprep.subr.bf16.mxu0 %v1127
    %1191 = vmatpush1.bf16.msra.mxu0 %v1126
    %1192 = vmatprep.subr.bf16.mxu0 %v1129
    %1193 = vmatpush1.bf16.msra.mxu0 %v1128
    %1194 = vmatprep.subr.bf16.mxu0 %v1131
    %1195 = vmatpush1.bf16.msra.mxu0 %v1130
    %1196 = vmatprep.mubr.bf16.mxu0 %v958
    %1197 = vmatmul.mubr.bf16.gmra.mrb[0].mxu0 %v957
    %v1198 = vpop.f32.mrb[0].mxu0
    %v1199 = vadd.f32 %v997, %v1198
    %v1200 = vpop.f32.mrb[0].mxu0
    %v1201 = vadd.f32 %v1001, %v1200
    %v1202 = vpop.f32.mrb[0].mxu0
    %v1203 = vpop.f32.mrb[0].mxu0
    %1204 = vdwg.mxu0
    %v1205 = vmax.f32 %v1199, 0.0
    %v1206 = vmax.f32 %v1201, 0.0
    %v1207 = vpack.c.bf16 %v1205, %v1205
    %v1208 = vpack.c.bf16 %v1206, %v1206
    %v1209 = vld [vmem:[#allocation10] sm:$0xff]
    %v1210 = vld [vmem:[#allocation10 + $0x8] sm:$0xff]
    %v1211 = vld [vmem:[#allocation10 + $0x10] sm:$0xff]
    %v1212 = vld [vmem:[#allocation10 + $0x18] sm:$0xff]
    %v1213 = vld [vmem:[#allocation10 + $0x20] sm:$0xff]
    %v1214 = vld [vmem:[#allocation10 + $0x28] sm:$0xff]
    %v1215 = vld [vmem:[#allocation10 + $0x30] sm:$0xff]
    %v1216 = vld [vmem:[#allocation10 + $0x38] sm:$0xff]
    %v1217 = vld [vmem:[#allocation10 + $0x40] sm:$0xff]
    %v1218 = vld [vmem:[#allocation10 + $0x48] sm:$0xff]
    %v1219 = vld [vmem:[#allocation10 + $0x50] sm:$0xff]
    %v1220 = vld [vmem:[#allocation10 + $0x58] sm:$0xff]
    %v1221 = vld [vmem:[#allocation10 + $0x60] sm:$0xff]
    %v1222 = vld [vmem:[#allocation10 + $0x68] sm:$0xff]
    %v1223 = vld [vmem:[#allocation10 + $0x70] sm:$0xff]
    %v1224 = vld [vmem:[#allocation10 + $0x78] sm:$0xff]
    %v1225 = vld [vmem:[#allocation10 + $0x80] sm:$0xff]
    %v1226 = vld [vmem:[#allocation10 + $0x88] sm:$0xff]
    %v1227 = vld [vmem:[#allocation10 + $0x90] sm:$0xff]
    %v1228 = vld [vmem:[#allocation10 + $0x98] sm:$0xff]
    %v1229 = vld [vmem:[#allocation10 + $0xa0] sm:$0xff]
    %v1230 = vld [vmem:[#allocation10 + $0xa8] sm:$0xff]
    %v1231 = vld [vmem:[#allocation10 + $0xb0] sm:$0xff]
    %v1232 = vld [vmem:[#allocation10 + $0xb8] sm:$0xff]
    %v1233 = vld [vmem:[#allocation10 + $0xc0] sm:$0xff]
    %v1234 = vld [vmem:[#allocation10 + $0xc8] sm:$0xff]
    %v1235 = vld [vmem:[#allocation10 + $0xd0] sm:$0xff]
    %v1236 = vld [vmem:[#allocation10 + $0xd8] sm:$0xff]
    %v1237 = vld [vmem:[#allocation10 + $0xe0] sm:$0xff]
    %v1238 = vld [vmem:[#allocation10 + $0xe8] sm:$0xff]
    %v1239 = vld [vmem:[#allocation10 + $0xf0] sm:$0xff]
    %v1240 = vld [vmem:[#allocation10 + $0xf8] sm:$0xff]
    %s1241 = scalar_lea.vmem %s6, 4
    %v1242 = vld [vmem:[%s1241] ss:$8 sm:$0x3]
    %v1244 = vlaneseq
    %v1245 = vshrl.u32 %v1244, 7
    %v1246 = vsub.s32 0, %v1245
    %v1247 = vrot.slane %v1242, %v1246
    %v1248 = vlaneseq
    %v1249 = vshrl.u32 %v1248, 7
    %v1250 = vsub.s32 1, %v1249
    %v1251 = vrot.slane %v1242, %v1250
    %v1286 = vunpack.c.l.b16 %v1209
    %v1287 = vunpack.c.h.b16 %v1209
    %v1288 = vunpack.c.l.b16 %v1210
    %v1289 = vunpack.c.h.b16 %v1210
    %v1290 = vunpack.c.l.b16 %v1211
    %v1291 = vunpack.c.h.b16 %v1211
    %v1292 = vunpack.c.l.b16 %v1212
    %v1293 = vunpack.c.h.b16 %v1212
    %v1294 = vunpack.c.l.b16 %v1213
    %v1295 = vunpack.c.h.b16 %v1213
    %v1296 = vunpack.c.l.b16 %v1214
    %v1297 = vunpack.c.h.b16 %v1214
    %v1298 = vunpack.c.l.b16 %v1215
    %v1299 = vunpack.c.h.b16 %v1215
    %v1300 = vunpack.c.l.b16 %v1216
    %v1301 = vunpack.c.h.b16 %v1216
    %v1302 = vunpack.c.l.b16 %v1217
    %v1303 = vunpack.c.h.b16 %v1217
    %v1304 = vunpack.c.l.b16 %v1218
    %v1305 = vunpack.c.h.b16 %v1218
    %v1306 = vunpack.c.l.b16 %v1219
    %v1307 = vunpack.c.h.b16 %v1219
    %v1308 = vunpack.c.l.b16 %v1220
    %v1309 = vunpack.c.h.b16 %v1220
    %v1310 = vunpack.c.l.b16 %v1221
    %v1311 = vunpack.c.h.b16 %v1221
    %v1312 = vunpack.c.l.b16 %v1222
    %v1313 = vunpack.c.h.b16 %v1222
    %v1314 = vunpack.c.l.b16 %v1223
    %v1315 = vunpack.c.h.b16 %v1223
    %v1316 = vunpack.c.l.b16 %v1224
    %v1317 = vunpack.c.h.b16 %v1224
    %v1318 = vunpack.c.l.b16 %v1225
    %v1319 = vunpack.c.h.b16 %v1225
    %v1320 = vunpack.c.l.b16 %v1226
    %v1321 = vunpack.c.h.b16 %v1226
    %v1322 = vunpack.c.l.b16 %v1227
    %v1323 = vunpack.c.h.b16 %v1227
    %v1324 = vunpack.c.l.b16 %v1228
    %v1325 = vunpack.c.h.b16 %v1228
    %v1326 = vunpack.c.l.b16 %v1229
    %v1327 = vunpack.c.h.b16 %v1229
    %v1328 = vunpack.c.l.b16 %v1230
    %v1329 = vunpack.c.h.b16 %v1230
    %v1330 = vunpack.c.l.b16 %v1231
    %v1331 = vunpack.c.h.b16 %v1231
    %v1332 = vunpack.c.l.b16 %v1232
    %v1333 = vunpack.c.h.b16 %v1232
    %v1334 = vunpack.c.l.b16 %v1233
    %v1335 = vunpack.c.h.b16 %v1233
    %v1336 = vunpack.c.l.b16 %v1234
    %v1337 = vunpack.c.h.b16 %v1234
    %v1338 = vunpack.c.l.b16 %v1235
    %v1339 = vunpack.c.h.b16 %v1235
    %v1340 = vunpack.c.l.b16 %v1236
    %v1341 = vunpack.c.h.b16 %v1236
    %v1342 = vunpack.c.l.b16 %v1237
    %v1343 = vunpack.c.h.b16 %v1237
    %v1344 = vunpack.c.l.b16 %v1238
    %v1345 = vunpack.c.h.b16 %v1238
    %v1346 = vunpack.c.l.b16 %v1239
    %v1347 = vunpack.c.h.b16 %v1239
    %v1348 = vunpack.c.l.b16 %v1240
    %v1349 = vunpack.c.h.b16 %v1240
    %v1350 = vpack.c.b16 %v1288, %v1286
    %v1351 = vpack.c.b16 %v1289, %v1287
    %v1352 = vpack.c.b16 %v1292, %v1290
    %v1353 = vpack.c.b16 %v1293, %v1291
    %v1354 = vpack.c.b16 %v1296, %v1294
    %v1355 = vpack.c.b16 %v1297, %v1295
    %v1356 = vpack.c.b16 %v1300, %v1298
    %v1357 = vpack.c.b16 %v1301, %v1299
    %v1358 = vpack.c.b16 %v1304, %v1302
    %v1359 = vpack.c.b16 %v1305, %v1303
    %v1360 = vpack.c.b16 %v1308, %v1306
    %v1361 = vpack.c.b16 %v1309, %v1307
    %v1362 = vpack.c.b16 %v1312, %v1310
    %v1363 = vpack.c.b16 %v1313, %v1311
    %v1364 = vpack.c.b16 %v1316, %v1314
    %v1365 = vpack.c.b16 %v1317, %v1315
    %v1366 = vpack.c.b16 %v1320, %v1318
    %v1367 = vpack.c.b16 %v1321, %v1319
    %v1368 = vpack.c.b16 %v1324, %v1322
    %v1369 = vpack.c.b16 %v1325, %v1323
    %v1370 = vpack.c.b16 %v1328, %v1326
    %v1371 = vpack.c.b16 %v1329, %v1327
    %v1372 = vpack.c.b16 %v1332, %v1330
    %v1373 = vpack.c.b16 %v1333, %v1331
    %v1374 = vpack.c.b16 %v1336, %v1334
    %v1375 = vpack.c.b16 %v1337, %v1335
    %v1376 = vpack.c.b16 %v1340, %v1338
    %v1377 = vpack.c.b16 %v1341, %v1339
    %v1378 = vpack.c.b16 %v1344, %v1342
    %v1379 = vpack.c.b16 %v1345, %v1343
    %v1380 = vpack.c.b16 %v1348, %v1346
    %v1381 = vpack.c.b16 %v1349, %v1347
    %1414 = vmatprep.subr.bf16.mxu0 %v1351
    %1415 = vmatpush1.bf16.msra.mxu0 %v1350
    %1416 = vmatprep.subr.bf16.mxu0 %v1353
    %1417 = vmatpush1.bf16.msra.mxu0 %v1352
    %1418 = vmatprep.subr.bf16.mxu0 %v1355
    %1419 = vmatpush1.bf16.msra.mxu0 %v1354
    %1420 = vmatprep.subr.bf16.mxu0 %v1357
    %1421 = vmatpush1.bf16.msra.mxu0 %v1356
    %1422 = vmatprep.subr.bf16.mxu0 %v1359
    %1423 = vmatpush1.bf16.msra.mxu0 %v1358
    %1424 = vmatprep.subr.bf16.mxu0 %v1361
    %1425 = vmatpush1.bf16.msra.mxu0 %v1360
    %1426 = vmatprep.subr.bf16.mxu0 %v1363
    %1427 = vmatpush1.bf16.msra.mxu0 %v1362
    %1428 = vmatprep.subr.bf16.mxu0 %v1365
    %1429 = vmatpush1.bf16.msra.mxu0 %v1364
    %1430 = vmatprep.subr.bf16.mxu0 %v1367
    %1431 = vmatpush1.bf16.msra.mxu0 %v1366
    %1432 = vmatprep.subr.bf16.mxu0 %v1369
    %1433 = vmatpush1.bf16.msra.mxu0 %v1368
    %1434 = vmatprep.subr.bf16.mxu0 %v1371
    %1435 = vmatpush1.bf16.msra.mxu0 %v1370
    %1436 = vmatprep.subr.bf16.mxu0 %v1373
    %1437 = vmatpush1.bf16.msra.mxu0 %v1372
    %1438 = vmatprep.subr.bf16.mxu0 %v1375
    %1439 = vmatpush1.bf16.msra.mxu0 %v1374
    %1440 = vmatprep.subr.bf16.mxu0 %v1377
    %1441 = vmatpush1.bf16.msra.mxu0 %v1376
    %1442 = vmatprep.subr.bf16.mxu0 %v1379
    %1443 = vmatpush1.bf16.msra.mxu0 %v1378
    %1444 = vmatprep.subr.bf16.mxu0 %v1381
    %1445 = vmatpush1.bf16.msra.mxu0 %v1380
    %1446 = vmatprep.mubr.bf16.mxu0 %v1208
    %1447 = vmatmul.mubr.bf16.gmra.mrb[0].mxu0 %v1207
    %v1448 = vpop.f32.mrb[0].mxu0
    %v1449 = vadd.f32 %v1247, %v1448
    %v1450 = vpop.f32.mrb[0].mxu0
    %v1451 = vadd.f32 %v1251, %v1450
    %v1452 = vpop.f32.mrb[0].mxu0
    %v1453 = vpop.f32.mrb[0].mxu0
    %1454 = vdwg.mxu0
    %v1455 = vpack.c.bf16 %v1449, %v1449
    %v1456 = vpack.c.bf16 %v1451, %v1451
    %v1459 = vunpack.c.l.b16 %v1455
    %v1460 = vunpack.c.l.b16 %v1456
    %v1461 = vpack.c.b16 %v1460, %v1459
    %1463 = vst [vmem:[%s7] sm:$0xff] %v1461
    // Predicated region
    $region54: #{improved_nn_forward.1} parent=1 // pred_check
      _
    $region55: #{improved_nn_forward.1} parent=1 // pred_check_branch
      %1465 = sbr.rel (0) target = $region57
    $region56: #{improved_nn_forward.1} parent=1 // pred_region
      _
    $region57: #{improved_nn_forward.1} parent=1 // pred_fallthru
      _
    // Predicated region
    $region58: #{improved_nn_forward.1} parent=1 // pred_check
      _
    $region59: #{improved_nn_forward.1} parent=1 // pred_check_branch
      %1467 = sbr.rel (0) target = $region61
    $region60: #{improved_nn_forward.1} parent=1 // pred_region
      _
    $region61: #{improved_nn_forward.1} parent=1 // pred_fallthru
      _
    %1468 = vsyncpa [#allocation3], 1
    %1469 = vsyncpa [#allocation5], 1
    %1470 = vsyncpa [#allocation8], 1
    %1471 = vsyncpa [#allocation11], 1

</llo_original>
